<compile_context>
chip_gen: v6e
topology: v6e:2x2x1
jax: 0.10.0
libtpu: 0.0.40
codegen_flags: <defaults>
</compile_context>

<pallas_src>
import functools

import jax
import jax.numpy as jnp
from jax.experimental import pallas as pl
from jax.experimental.pallas import tpu as pltpu


_LANES = 128
_MAX_TILE_ROWS = 512      # 512 x 128 f32 = 256 KiB per input tile (v7x-safe)
_MAX_TILE_BATCH = 512

_COMPILER_PARAMS = pltpu.CompilerParams(
    dimension_semantics=("arbitrary",),          # reduction axis
    vmem_limit_bytes=32 * 1024 * 1024,
)
_SCALAR_OUT = jax.ShapeDtypeStruct((1, 1), jnp.float32)


def _round_up(x: int, m: int) -> int:
    return -(-x // m) * m


def _lane_dense(x, cast_float: bool = False):
    """Flatten to 1-D, zero-pad, reshape to a lane-dense (rows, 128) slab."""
    x = jnp.asarray(x)
    if cast_float and not jnp.issubdtype(x.dtype, jnp.floating):
        x = x.astype(jnp.float32)                # matches PyTorch targets.float()
    x = x.reshape(-1)
    n = int(x.shape[0])
    rows = _round_up(max(1, -(-n // _LANES)), 8)
    if rows > _MAX_TILE_ROWS:
        rows = _round_up(rows, _MAX_TILE_ROWS)
        tile = _MAX_TILE_ROWS
    else:
        tile = rows
    pad = rows * _LANES - n
    if pad:
        x = jnp.pad(x, (0, pad))                 # zero padding
    return x.reshape(rows, _LANES), n, tile


# ---------------------------------------------------------------------------
# Kernels
# ---------------------------------------------------------------------------
def _bce_kernel(p_ref, t_ref, o_ref, *, from_logits: bool, n_valid: int,
                tile_rows: int):
    """Binary cross entropy, mean reduction, over a lane-dense (tile,128) block."""
    i = pl.program_id(0)

    @pl.when(i == 0)
    def _():
        o_ref[...] = jnp.zeros_like(o_ref)

    p = p_ref[...].astype(jnp.float32)
    t = t_ref[...].astype(jnp.float32)

    if from_logits:
        # stable BCE-with-logits: max(x,0) - x*t + log(1 + exp(-|x|))
        loss = (jnp.maximum(p, 0.0) - p * t
                + jnp.log(1.0 + jnp.exp(-jnp.abs(p))))
    else:
        # PyTorch nn.BCELoss clamps each log term at -100.
        log_p = jnp.maximum(jnp.log(p), -100.0)
        log_1mp = jnp.maximum(jnp.log(1.0 - p), -100.0)
        loss = -(t * log_p + (1.0 - t) * log_1mp)

    # mask out padded elements (flat index >= n_valid)
    row = jax.lax.broadcasted_iota(jnp.int32, loss.shape, 0)
    col = jax.lax.broadcasted_iota(jnp.int32, loss.shape, 1)
    flat = (i * tile_rows + row) * _LANES + col
    loss = jnp.where(flat < n_valid, loss, 0.0)

    o_ref[...] += jnp.sum(loss)

    @pl.when(i == pl.num_programs(0) - 1)
    def _():
        o_ref[...] = o_ref[...] * (1.0 / n_valid)     # compile-time constant 1/N


def _mse_kernel(p_ref, t_ref, o_ref, *, n_valid: int):
    """Mean squared error, mean reduction (zero padding is exactly neutral)."""
    i = pl.program_id(0)

    @pl.when(i == 0)
    def _():
        o_ref[...] = jnp.zeros_like(o_ref)

    p = p_ref[...].astype(jnp.float32)
    t = t_ref[...].astype(jnp.float32)
    d = p - t                                        # padded diff == 0 exactly
    o_ref[...] += jnp.sum(d * d)

    @pl.when(i == pl.num_programs(0) - 1)
    def _():
        o_ref[...] = o_ref[...] * (1.0 / n_valid)


def _ce_kernel(x_ref, t_ref, w_ref, num_ref, den_ref, *, n_valid: int,
               tile_b: int):
    """Weighted cross entropy partial sums over a (tile_b, C) batch tile."""
    i = pl.program_id(0)

    @pl.when(i == 0)
    def _():
        num_ref[...] = jnp.zeros_like(num_ref)
        den_ref[...] = jnp.zeros_like(den_ref)

    x = x_ref[...].astype(jnp.float32)               # [tile_b, C] logits
    t = t_ref[...]                                   # [tile_b, 1] int32 class ids
    w = w_ref[...].astype(jnp.float32)               # [1, C] class weights

    # numerically stable log-softmax over the class (lane) axis
    m = jnp.max(x, axis=-1, keepdims=True)
    lse = jnp.log(jnp.sum(jnp.exp(x - m), axis=-1, keepdims=True)) + m
    logp = x - lse

    col = jax.lax.broadcasted_iota(jnp.int32, x.shape, 1)
    onehot = (col == t).astype(jnp.float32)          # [tile_b, C]
    nll_i = -jnp.sum(onehot * logp, axis=-1, keepdims=True)   # [tile_b, 1]
    w_i = jnp.sum(onehot * w, axis=-1, keepdims=True)         # [tile_b, 1]

    # mask out padded batch rows
    row = jax.lax.broadcasted_iota(jnp.int32, (tile_b, 1), 0) + i * tile_b
    valid = (row < n_valid).astype(jnp.float32)

    num_ref[...] += jnp.sum(valid * w_i * nll_i)
    den_ref[...] += jnp.sum(valid * w_i)


# ---------------------------------------------------------------------------
# Pallas wrappers
# ---------------------------------------------------------------------------
def bce_loss(predictions, targets, from_logits: bool = False):
    p2, n, tile = _lane_dense(predictions)                    # native dtype
    t2, _, _ = _lane_dense(targets, cast_float=True)
    rows = p2.shape[0]
    out = pl.pallas_call(
        functools.partial(_bce_kernel, from_logits=from_logits,
                          n_valid=n, tile_rows=tile),
        out_shape=_SCALAR_OUT,
        grid=(rows // tile,),
        in_specs=[pl.BlockSpec((tile, _LANES), lambda i: (i, 0)),
                  pl.BlockSpec((tile, _LANES), lambda i: (i, 0))],
        out_specs=pl.BlockSpec((1, 1), lambda i: (0, 0)),
        compiler_params=_COMPILER_PARAMS,
    )(p2, t2)
    return out[0, 0]


def mse_loss(predictions, targets):
    p2, n, tile = _lane_dense(predictions)
    t2, _, _ = _lane_dense(targets, cast_float=True)
    rows = p2.shape[0]
    out = pl.pallas_call(
        functools.partial(_mse_kernel, n_valid=n),
        out_shape=_SCALAR_OUT,
        grid=(rows // tile,),
        in_specs=[pl.BlockSpec((tile, _LANES), lambda i: (i, 0)),
                  pl.BlockSpec((tile, _LANES), lambda i: (i, 0))],
        out_specs=pl.BlockSpec((1, 1), lambda i: (0, 0)),
        compiler_params=_COMPILER_PARAMS,
    )(p2, t2)
    return out[0, 0]


def ce_loss(predictions, targets, class_weights=None):
    x = jnp.asarray(predictions)                              # native dtype
    if x.ndim == 1:
        x = x[None, :]
    B, C = int(x.shape[0]), int(x.shape[1])
    t = jnp.asarray(targets).reshape(-1).astype(jnp.int32)
    if class_weights is None:
        w = jnp.ones((1, C), jnp.float32)
    else:
        w = jnp.asarray(class_weights, jnp.float32).reshape(1, C)

    tile_b = min(_MAX_TILE_BATCH, _round_up(B, 8))
    b_pad = _round_up(B, tile_b)
    if b_pad != B:
        x = jnp.pad(x, ((0, b_pad - B), (0, 0)))
        t = jnp.pad(t, (0, b_pad - B))                        # class 0, masked out
    t = t.reshape(b_pad, 1)

    num, den = pl.pallas_call(
        functools.partial(_ce_kernel, n_valid=B, tile_b=tile_b),
        out_shape=(_SCALAR_OUT, _SCALAR_OUT),
        grid=(b_pad // tile_b,),
        in_specs=[pl.BlockSpec((tile_b, C), lambda i: (i, 0)),
                  pl.BlockSpec((tile_b, 1), lambda i: (i, 0)),
                  pl.BlockSpec((1, C), lambda i: (0, 0))],
        out_specs=(pl.BlockSpec((1, 1), lambda i: (0, 0)),
                   pl.BlockSpec((1, 1), lambda i: (0, 0))),
        compiler_params=_COMPILER_PARAMS,
    )(x, t, w)
    return num[0, 0] / den[0, 0]


# ---------------------------------------------------------------------------
# PropertyLoss module (JAX equivalent of the PyTorch nn.Module)
# ---------------------------------------------------------------------------
class PropertyLoss:
    """分子性质预测损失函数 (JAX / Pallas port)."""

    def __init__(self, task_type='classification', num_labels=1, class_weights=None):
        self.task_type = task_type
        self.num_labels = num_labels
        self.class_weights = class_weights

    def __call__(self, predictions, targets):
        if self.task_type == 'classification':
            if self.num_labels == 1:
                # BCELoss(predictions.squeeze(), targets.float().squeeze())
                return bce_loss(predictions, targets, from_logits=False)
            elif self.num_labels == 0:
                # BCELoss(sigmoid(predictions).squeeze(), ...) -> stable logits form
                return bce_loss(predictions, targets, from_logits=True)
            elif jnp.ndim(targets) > 1 and jnp.shape(targets)[1] > 1:
                # multi-label: F.binary_cross_entropy(predictions, targets.float())
                return bce_loss(predictions, targets, from_logits=False)
            else:
                # CrossEntropyLoss(weight=class_weights)(predictions, targets.long())
                # TODO(synk): PyTorch default ignore_index=-100 is not handled
                # (targets are assumed to always be valid class ids).
                return ce_loss(predictions, targets, self.class_weights)
        else:
            # MSELoss(predictions, targets.float())
            return mse_loss(predictions, targets)


# ---------------------------------------------------------------------------
# Demo / smoke test
# ---------------------------------------------------------------------------
if __name__ == "__main__":
    key = jax.random.PRNGKey(0)
    k1, k2, k3, k4, k5, k6, k7 = jax.random.split(key, 7)

    B, C = 8, 4

    # --- classification, multi-class (CrossEntropyLoss with class weights) ---
    logits = jax.random.normal(k1, (B, C), jnp.float32)
    cls_targets = jax.random.randint(k2, (B,), 0, C, jnp.int32)
    class_weights = jnp.array([1.0, 2.0, 0.5, 1.5], jnp.float32)
    ce_module = PropertyLoss('classification', num_labels=C, class_weights=class_weights)
    loss_ce = ce_module(logits, cls_targets)

    # --- classification, binary (BCELoss on probabilities) ---
    probs = jax.nn.sigmoid(jax.random.normal(k3, (B, 1), jnp.float32))
    bin_targets = jax.random.bernoulli(k4, 0.5, (B, 1)).astype(jnp.float32)
    bce_module = PropertyLoss('classification', num_labels=1)
    loss_bce = bce_module(probs, bin_targets)

    # --- classification, num_labels == 0 path (BCE on sigmoid(logits)) ---
    bin_logits = jax.random.normal(k7, (B, 1), jnp.float32)
    bcel_module = PropertyLoss('classification', num_labels=0)
    loss_bcel = bcel_module(bin_logits, bin_targets)

    # --- regression (MSELoss) ---
    preds_reg = jax.random.normal(k5, (B, C), jnp.float32)
    tgts_reg = jax.random.normal(k6, (B, C), jnp.float32)
    mse_module = PropertyLoss('regression', num_labels=C)
    loss_mse = mse_module(preds_reg, tgts_reg)

    jax.block_until_ready((loss_ce, loss_bce, loss_bcel, loss_mse))

    # sanity checks against pure-JAX references
    logp_ref = jax.nn.log_softmax(logits, axis=-1)
    w_i = class_weights[cls_targets]
    ref_ce = jnp.sum(w_i * -logp_ref[jnp.arange(B), cls_targets]) / jnp.sum(w_i)
    ref_bce = jnp.mean(-(bin_targets * jnp.log(probs)
                         + (1 - bin_targets) * jnp.log(1 - probs)))
    p_sig = jax.nn.sigmoid(bin_logits)
    ref_bcel = jnp.mean(-(bin_targets * jnp.log(p_sig)
                          + (1 - bin_targets) * jnp.log(1 - p_sig)))
    ref_mse = jnp.mean((preds_reg - tgts_reg) ** 2)

    assert jnp.allclose(loss_ce, ref_ce, atol=1e-5), (loss_ce, ref_ce)
    assert jnp.allclose(loss_bce, ref_bce, atol=1e-5), (loss_bce, ref_bce)
    assert jnp.allclose(loss_bcel, ref_bcel, atol=1e-5), (loss_bcel, ref_bcel)
    assert jnp.allclose(loss_mse, ref_mse, atol=1e-5), (loss_mse, ref_mse)

    print("KERNEL_OK")
</pallas_src>

<mosaic_0001>
module attributes {stable_mosaic.version = 11 : i64} {
  func.func @_ce_kernel(%arg0: i32, %arg1: memref<8x4xf32, #tpu.memory_space<vmem>>, %arg2: memref<8x1xi32, #tpu.memory_space<vmem>>, %arg3: memref<1x4xf32, #tpu.memory_space<vmem>>, %arg4: memref<1x1xf32, #tpu.memory_space<vmem>>, %arg5: memref<1x1xf32, #tpu.memory_space<vmem>>) attributes {dimension_semantics = [#tpu.dimension_semantics<arbitrary>], iteration_bounds = array<i64: 1>, scalar_prefetch = 0 : i64, scratch_operands = 0 : i64, tpu.core_type = #tpu.core_type<tc>, window_params = [{transform_indices = @transform_0, window_bounds = array<i64: 8, 4>}, {transform_indices = @transform_1, window_bounds = array<i64: 8, 1>}, {pipeline_mode = #tpu.pipeline_mode<synchronous>, transform_indices = @transform_2, window_bounds = array<i64: 1, 4>}, {pipeline_mode = #tpu.pipeline_mode<synchronous>, transform_indices = @transform_3, window_bounds = array<i64: 1, 1>}, {pipeline_mode = #tpu.pipeline_mode<synchronous>, transform_indices = @transform_4, window_bounds = array<i64: 1, 1>}]} {
    %c0_i32 = arith.constant 0 : i32
    %0 = arith.cmpi eq, %arg0, %c0_i32 : i32
    %1 = arith.extui %0 : i1 to i32
    %c0_i32_0 = arith.constant 0 : i32
    %2 = arith.cmpi ne, %1, %c0_i32_0 : i32
    scf.if %2 {
      %cst_21 = arith.constant 0.000000e+00 : f32
      %58 = vector.broadcast %cst_21 : f32 to vector<1x1xf32>
      %c0_22 = arith.constant 0 : index
      %c0_23 = arith.constant 0 : index
      %59 = vector.load %arg4[%c0_22, %c0_23] : memref<1x1xf32, #tpu.memory_space<vmem>>, vector<1x1xf32>
      tpu.vector_store %arg4[%c0_22, %c0_23], %58 {strides = array<i32>} : memref<1x1xf32, #tpu.memory_space<vmem>>, vector<1x1xf32>,
      %cst_24 = arith.constant 0.000000e+00 : f32
      %60 = vector.broadcast %cst_24 : f32 to vector<1x1xf32>
      %c0_25 = arith.constant 0 : index
      %c0_26 = arith.constant 0 : index
      %61 = vector.load %arg5[%c0_25, %c0_26] : memref<1x1xf32, #tpu.memory_space<vmem>>, vector<1x1xf32>
      tpu.vector_store %arg5[%c0_25, %c0_26], %60 {strides = array<i32>} : memref<1x1xf32, #tpu.memory_space<vmem>>, vector<1x1xf32>,
    } else {
    }
    %c0 = arith.constant 0 : index
    %c0_1 = arith.constant 0 : index
    %3 = vector.load %arg1[%c0, %c0_1] : memref<8x4xf32, #tpu.memory_space<vmem>>, vector<8x4xf32>
    %c0_2 = arith.constant 0 : index
    %c0_3 = arith.constant 0 : index
    %4 = vector.load %arg2[%c0_2, %c0_3] : memref<8x1xi32, #tpu.memory_space<vmem>>, vector<8x1xi32>
    %c0_4 = arith.constant 0 : index
    %c0_5 = arith.constant 0 : index
    %5 = vector.load %arg3[%c0_4, %c0_5] : memref<1x4xf32, #tpu.memory_space<vmem>>, vector<1x4xf32>
    %cst = arith.constant dense<0xFF800000> : vector<8xf32>
    %6 = vector.multi_reduction <maximumf>, %3, %cst [1] : vector<8x4xf32> to vector<8xf32>
    %7 = vector.shape_cast %6 : vector<8xf32> to vector<8x1xf32>
    %8 = vector.broadcast %7 : vector<8x1xf32> to vector<8x4xf32>
    %9 = arith.subf %3, %8 : vector<8x4xf32>
    %10 = math.exp %9 : vector<8x4xf32>
    %cst_6 = arith.constant dense<0.000000e+00> : vector<8xf32>
    %11 = vector.multi_reduction <add>, %10, %cst_6 [1] : vector<8x4xf32> to vector<8xf32>
    %12 = vector.shape_cast %11 : vector<8xf32> to vector<8x1xf32>
    %13 = math.log %12 : vector<8x1xf32>
    %14 = arith.addf %13, %7 : vector<8x1xf32>
    %15 = vector.broadcast %14 : vector<8x1xf32> to vector<8x4xf32>
    %16 = arith.subf %3, %15 : vector<8x4xf32>
    %17 = tpu.iota {dimensions = array<i32: 1>} : vector<8x4xi32>
    %18 = vector.broadcast %4 : vector<8x1xi32> to vector<8x4xi32>
    %19 = arith.cmpi eq, %17, %18 : vector<8x4xi32>
    %20 = arith.extui %19 : vector<8x4xi1> to vector<8x4xi32>
    %21 = arith.sitofp %20 : vector<8x4xi32> to vector<8x4xf32>
    %22 = arith.mulf %21, %16 : vector<8x4xf32>
    %cst_7 = arith.constant dense<0.000000e+00> : vector<8xf32>
    %23 = vector.multi_reduction <add>, %22, %cst_7 [1] : vector<8x4xf32> to vector<8xf32>
    %24 = vector.shape_cast %23 : vector<8xf32> to vector<8x1xf32>
    %cst_8 = arith.constant 0.000000e+00 : f32
    %25 = vector.broadcast %cst_8 : f32 to vector<8x1xf32>
    %26 = arith.subf %25, %24 : vector<8x1xf32>
    %27 = vector.broadcast %5 : vector<1x4xf32> to vector<8x4xf32>
    %28 = arith.mulf %21, %27 : vector<8x4xf32>
    %cst_9 = arith.constant dense<0.000000e+00> : vector<8xf32>
    %29 = vector.multi_reduction <add>, %28, %cst_9 [1] : vector<8x4xf32> to vector<8xf32>
    %30 = vector.shape_cast %29 : vector<8xf32> to vector<8x1xf32>
    %31 = tpu.iota {dimensions = array<i32: 0>} : vector<8x1xi32>
    %c8_i32 = arith.constant 8 : i32
    %32 = arith.muli %arg0, %c8_i32 : i32
    %33 = vector.broadcast %32 : i32 to vector<8x1xi32>
    %34 = arith.addi %31, %33 : vector<8x1xi32>
    %c8_i32_10 = arith.constant 8 : i32
    %35 = vector.broadcast %c8_i32_10 : i32 to vector<8x1xi32>
    %36 = arith.cmpi slt, %34, %35 : vector<8x1xi32>
    %37 = arith.extui %36 : vector<8x1xi1> to vector<8x1xi32>
    %38 = arith.sitofp %37 : vector<8x1xi32> to vector<8x1xf32>
    %c0_11 = arith.constant 0 : index
    %c0_12 = arith.constant 0 : index
    %39 = vector.load %arg4[%c0_11, %c0_12] : memref<1x1xf32, #tpu.memory_space<vmem>>, vector<1x1xf32>
    %40 = arith.mulf %38, %30 : vector<8x1xf32>
    %41 = arith.mulf %40, %26 : vector<8x1xf32>
    %42 = vector.shape_cast %41 : vector<8x1xf32> to vector<1x8x1xf32>
    %cst_13 = arith.constant dense<0.000000e+00> : vector<1xf32>
    %43 = vector.multi_reduction <add>, %42, %cst_13 [1, 2] : vector<1x8x1xf32> to vector<1xf32>
    %44 = vector.shape_cast %43 : vector<1xf32> to vector<1x1x1xf32>
    %45 = vector.extract %44[0, 0, 0] : f32 from vector<1x1x1xf32>
    %46 = vector.broadcast %45 : f32 to vector<1x1xf32>
    %47 = arith.addf %39, %46 : vector<1x1xf32>
    %c0_14 = arith.constant 0 : index
    %c0_15 = arith.constant 0 : index
    %48 = vector.load %arg4[%c0_14, %c0_15] : memref<1x1xf32, #tpu.memory_space<vmem>>, vector<1x1xf32>
    tpu.vector_store %arg4[%c0_14, %c0_15], %47 {strides = array<i32>} : memref<1x1xf32, #tpu.memory_space<vmem>>, vector<1x1xf32>,
    %c0_16 = arith.constant 0 : index
    %c0_17 = arith.constant 0 : index
    %49 = vector.load %arg5[%c0_16, %c0_17] : memref<1x1xf32, #tpu.memory_space<vmem>>, vector<1x1xf32>
    %50 = arith.mulf %38, %30 : vector<8x1xf32>
    %51 = vector.shape_cast %50 : vector<8x1xf32> to vector<1x8x1xf32>
    %cst_18 = arith.constant dense<0.000000e+00> : vector<1xf32>
    %52 = vector.multi_reduction <add>, %51, %cst_18 [1, 2] : vector<1x8x1xf32> to vector<1xf32>
    %53 = vector.shape_cast %52 : vector<1xf32> to vector<1x1x1xf32>
    %54 = vector.extract %53[0, 0, 0] : f32 from vector<1x1x1xf32>
    %55 = vector.broadcast %54 : f32 to vector<1x1xf32>
    %56 = arith.addf %49, %55 : vector<1x1xf32>
    %c0_19 = arith.constant 0 : index
    %c0_20 = arith.constant 0 : index
    %57 = vector.load %arg5[%c0_19, %c0_20] : memref<1x1xf32, #tpu.memory_space<vmem>>, vector<1x1xf32>
    tpu.vector_store %arg5[%c0_19, %c0_20], %56 {strides = array<i32>} : memref<1x1xf32, #tpu.memory_space<vmem>>, vector<1x1xf32>,
    return
  }
  func.func @transform_0(%arg0: i32) -> (i32, i32) {
    %c0_i32 = arith.constant 0 : i32
    %c0_i32_0 = arith.constant 0 : i32
    return %arg0, %c0_i32 : i32, i32
  }
  func.func @transform_1(%arg0: i32) -> (i32, i32) {
    %c0_i32 = arith.constant 0 : i32
    %c0_i32_0 = arith.constant 0 : i32
    return %arg0, %c0_i32 : i32, i32
  }
  func.func @transform_2(%arg0: i32) -> (i32, i32) {
    %c0_i32 = arith.constant 0 : i32
    %c0_i32_0 = arith.constant 0 : i32
    %c0_i32_1 = arith.constant 0 : i32
    return %c0_i32, %c0_i32_0 : i32, i32
  }
  func.func @transform_3(%arg0: i32) -> (i32, i32) {
    %c0_i32 = arith.constant 0 : i32
    %c0_i32_0 = arith.constant 0 : i32
    %c0_i32_1 = arith.constant 0 : i32
    return %c0_i32, %c0_i32_0 : i32, i32
  }
  func.func @transform_4(%arg0: i32) -> (i32, i32) {
    %c0_i32 = arith.constant 0 : i32
    %c0_i32_0 = arith.constant 0 : i32
    %c0_i32_1 = arith.constant 0 : i32
    return %c0_i32, %c0_i32_0 : i32, i32
  }
}

</mosaic_0001>

<llo_original>
// kernel: tpu_custom_call.1
$region0: #{tpu_custom_call.1}
  #allocation0 [shape = 'u32[]', space=smem, size = 0x4, offset = 0x4, fixed_abs, tag = 'smem constant byte address 0x4 - core index']
  #allocation1 [shape = 'u32[144,128]{1,0:T(1,128)}', space=vmem, size = 0x12000, scoped, tag = 'internal scratch']
  %s0 = inlined_call_operand.vmem [shape: f32[8,4], index: 0, kind: input, shape index: {}]
  %s1 = inlined_call_operand.vmem [shape: s32[8,1], index: 1, kind: input, shape index: {}]
  %s2 = inlined_call_operand.vmem [shape: f32[1,4], index: 2, kind: input, shape index: {}]
  %s3 = inlined_call_operand.hbm [shape: f32[1,1], index: 3, kind: output, shape index: {0}]
  %s4 = inlined_call_operand.hbm [shape: f32[1,1], index: 4, kind: output, shape index: {1}]
  %5 = xla_tuple %s3, %s4
  %s6 = sld [smem:[#allocation0]]
  $region34: #{tpu_custom_call.1} parent=0
    _
  %s8 = ssub.s32 1, %s6
  %s9 = scalar_select 0, %s8, %s6
  $region1: #{tpu_custom_call.1} parent=0
    #allocation2 [shape = 'u8[512]{0}', space=vmem, size = 0x400, scoped, tag = 'output window, operand 0, single buffered']
    #allocation3 [shape = 's32[1]{0}', space=sflag, size = 0x4, scoped, tag = 'scoped memory for tpu_custom_call.1']
    #allocation4 [shape = 'u8[512]{0}', space=vmem, size = 0x400, scoped, tag = 'output window, operand 1, single buffered']
    #allocation5 [shape = 's32[1]{0}', space=sflag, size = 0x4, scoped, tag = 'scoped memory for tpu_custom_call.1']
    %10 = vsyncpa [#allocation3], 0
    %11 = vsyncpa [#allocation5], 0
    // Predicated region
    $region2: #{tpu_custom_call.1} parent=1 // pred_check
      _
    $region3: #{tpu_custom_call.1} parent=1 // pred_check_branch
      %13 = sbr.rel (0) target = $region5
    $region4: #{tpu_custom_call.1} parent=1 // pred_region
      _
    $region5: #{tpu_custom_call.1} parent=1 // pred_fallthru
      _
    // Predicated region
    $region6: #{tpu_custom_call.1} parent=1 // pred_check
      _
    $region7: #{tpu_custom_call.1} parent=1 // pred_check_branch
      %15 = sbr.rel (0) target = $region9
    $region8: #{tpu_custom_call.1} parent=1 // pred_region
      _
    $region9: #{tpu_custom_call.1} parent=1 // pred_fallthru
      _
    // Predicated region
    $region10: #{tpu_custom_call.1} parent=1 // pred_check
      _
    $region11: #{tpu_custom_call.1} parent=1 // pred_check_branch
      %17 = sbr.rel (0) target = $region13
    $region12: #{tpu_custom_call.1} parent=1 // pred_region
      _
    $region13: #{tpu_custom_call.1} parent=1 // pred_fallthru
      _
    %p18 = scmp.eq.s32.totalorder 0, 0
    // Predicated region
    $region14: #{tpu_custom_call.1} parent=1 // pred_check
      %p19 = pneg %p18
    $region15: #{tpu_custom_call.1} parent=1 // pred_check_branch
      %21 = sbr.rel (%p19) target = $region17
    $region16: #{tpu_custom_call.1} parent=1 // pred_region
      %vm22 = vcmask 0
      %23 = vst.msk [vmem:[#allocation2] sm:$0x1] %vm22, 0.0
      %24 = vst.msk [vmem:[#allocation4] sm:$0x1] %vm22, 0.0
    $region17: #{tpu_custom_call.1} parent=1 // pred_fallthru
      _
    %v25 = vld [vmem:[%s0] sm:$0xff]
    %v26 = vld [vmem:[%s1] sm:$0xff]
    %v27 = vld [vmem:[%s2] sm:$0x1]
    %vm28 = vcmask 31744
    %v29 = vsel %vm28, %v25, -inf
    %30 = vmax.xlane.f32.xlu0 %v29
    %v31 = vpop.xlane.xlu0 %30
    %v32 = vsub.f32 %v25, %v31
    %v33 = vmul.f32 %v32, 1.442695
    %v34 = vpow.pop %v33
    %v35 = vsel %vm28, %v34, 0.0
    %36 = vadd.xlane.f32.xlu0 %v35
    %v37 = vpop.xlane.xlu0 %36
    %v38 = vlog2.pop %v37
    %v39 = vmul.f32 %v38, 0.6931472
    %v40 = vadd.f32 %v39, %v31
    %v41 = vsub.f32 %v25, %v40
    %v42 = vlaneseq
    %v43 = vand.u32 %v42, 127
    %44 = vset.pattern.permute.xlu0 0
    %45 = vperm.xlu0 %44, %v26
    %v46 = vpop.permute.xlu0 %45
    %vm47 = vcmp.eq.s32.totalorder %v43, %v46
    %v48 = vsel %vm47, 1, 0
    %v49 = vcvt.s32.f32 %v48
    %v50 = vmul.f32 %v49, %v41
    %v51 = vsel %vm28, %v50, 0.0
    %52 = vadd.xlane.f32.xlu0 %v51
    %v53 = vpop.xlane.xlu0 %52
    %v54 = vsub.f32 0.0, %v53
    %v56 = vlaneseq
    %v57 = vshrl.u32 %v56, 7
    %v58 = vsub.s32 0, %v57
    %v59 = vrot.slane %v27, %v58
    %v61 = vmul.f32 %v49, %v59
    %v62 = vsel %vm28, %v61, 0.0
    %63 = vadd.xlane.f32.xlu0 %v62
    %v64 = vpop.xlane.xlu0 %63
    %v65 = vlaneseq
    %v66 = vshrl.u32 %v65, 7
    %s67 = smul.u32 0, 8
    %v68 = vstv %s67
    %v69 = vadd.s32 %v66, %v68
    %vm70 = vcmp.lt.s32.totalorder %v69, 8
    %v71 = vsel %vm70, 1, 0
    %v72 = vcvt.s32.f32 %v71
    %v73 = vld [vmem:[#allocation2] sm:$0x1]
    %v74 = vmul.f32 %v72, %v64
    %v75 = vmul.f32 %v74, %v54
    %vm76 = vcmask 7168
    %v77 = vsel %vm76, %v75, 0.0
    %78 = vadd.xlane.f32.xlu0 %v77
    %v79 = vpop.xlane.xlu0 %78
    %v80 = vrot.slane %v79, 4
    %v81 = vadd.f32 %v79, %v80
    %v82 = vrot.slane %v81, 2
    %v83 = vadd.f32 %v81, %v82
    %v84 = vrot.slane %v83, 1
    %v85 = vadd.f32 %v83, %v84
    %s86 = vtos %v85
    %v87 = vstv %s86
    %v88 = vadd.f32 %v73, %v87
    %vm89 = vcmask 0
    %90 = vst.msk [vmem:[#allocation2] sm:$0x1] %vm89, %v88
    %v91 = vld [vmem:[#allocation4] sm:$0x1]
    %v92 = vsel %vm76, %v74, 0.0
    %93 = vadd.xlane.f32.xlu0 %v92
    %v94 = vpop.xlane.xlu0 %93
    %v95 = vrot.slane %v94, 4
    %v96 = vadd.f32 %v94, %v95
    %v97 = vrot.slane %v96, 2
    %v98 = vadd.f32 %v96, %v97
    %v99 = vrot.slane %v98, 1
    %v100 = vadd.f32 %v98, %v99
    %s101 = vtos %v100
    %v102 = vstv %s101
    %v103 = vadd.f32 %v91, %v102
    %104 = vst.msk [vmem:[#allocation4] sm:$0x1] %vm89, %v103
    // Predicated region
    $region18: #{tpu_custom_call.1} parent=1 // pred_check
      _
    $region19: #{tpu_custom_call.1} parent=1 // pred_check_branch
      %106 = sbr.rel (0) target = $region21
    $region20: #{tpu_custom_call.1} parent=1 // pred_region
      %s108 = ssub.s32 16, 16
      %109 = vsyncadd [#allocation3], %s108
      %s111 = sshll.u32 [#allocation2], 4
      %s112 = int_to_ptr.vmem [resolvable:$true] %s111
      %114 = dma.vmem_to_hbm [thread:$0]  %s112, 16, %s3, [#allocation3]
    $region21: #{tpu_custom_call.1} parent=1 // pred_fallthru
      _
    // Predicated region
    $region22: #{tpu_custom_call.1} parent=1 // pred_check
      _
    $region23: #{tpu_custom_call.1} parent=1 // pred_check_branch
      %116 = sbr.rel (0) target = $region25
    $region24: #{tpu_custom_call.1} parent=1 // pred_region
      %s118 = ssub.s32 16, 16
      %119 = vsyncadd [#allocation5], %s118
      %s121 = sshll.u32 [#allocation4], 4
      %s122 = int_to_ptr.vmem [resolvable:$true] %s121
      %124 = dma.vmem_to_hbm [thread:$0]  %s122, 16, %s4, [#allocation5]
    $region25: #{tpu_custom_call.1} parent=1 // pred_fallthru
      _
    // Predicated region
    $region26: #{tpu_custom_call.1} parent=1 // pred_check
      _
    $region27: #{tpu_custom_call.1} parent=1 // pred_check_branch
      %126 = sbr.rel (0) target = $region29
    $region28: #{tpu_custom_call.1} parent=1 // pred_region
      %127 = dma.done [#allocation3], 16
    $region29: #{tpu_custom_call.1} parent=1 // pred_fallthru
      _
    // Predicated region
    $region30: #{tpu_custom_call.1} parent=1 // pred_check
      _
    $region31: #{tpu_custom_call.1} parent=1 // pred_check_branch
      %129 = sbr.rel (0) target = $region33
    $region32: #{tpu_custom_call.1} parent=1 // pred_region
      %130 = dma.done [#allocation5], 16
    $region33: #{tpu_custom_call.1} parent=1 // pred_fallthru
      _
    %131 = vsyncpa [#allocation3], 1
    %132 = vsyncpa [#allocation5], 1

</llo_original>
